<compile_context>
chip_gen: v7x
topology: tpu7x:2x2x1
jax: 0.10.0
libtpu: 0.0.40
codegen_flags: <defaults>
</compile_context>

<pallas_src>
import functools

import jax
import jax.numpy as jnp
import numpy as np
from jax import lax
from jax.experimental import pallas as pl
from jax.experimental.pallas import tpu as pltpu

_MIB = 1 << 20
_LANE = 128
_TILE_BUDGET_BYTES = 28 * _MIB   # budget for live x-sized tile buffers (v5e/v7x safe)


def _round_up(a: int, b: int) -> int:
    return (a + b - 1) // b * b


def _pick_tile_n(N: int, C: int, xbytes: int):
    """Divisor-based tiling: pad N only up to a multiple of 128, then pick the largest
    lane-multiple tile (<= cap) that divides the padded N, so at most 127 columns are wasted."""
    n_pad = _round_up(N, _LANE)
    tile_max = 2048 if C >= 256 else 4096          # small C: bigger tiles, DMA-bound regime
    cap = _TILE_BUDGET_BYTES // (5 * C * xbytes)   # ~5 live x-sized buffers across both passes
    cap = max(_LANE, min(tile_max, (cap // _LANE) * _LANE))
    tile = _LANE
    for cand in range(min(cap, n_pad), _LANE - 1, -_LANE):
        if n_pad % cand == 0:
            tile = cand
            break
    return tile, n_pad


def _is_v7x() -> bool:
    """Best-effort detection of a 2-TensorCore-per-chip TPU (v7x); safe fallback is False."""
    try:
        kind = jax.devices()[0].device_kind.lower()
    except Exception:
        return False
    return ("v7" in kind) or ("7x" in kind)


def _vmem_limit_bytes(C, rb, tile_n, xbytes, attn_bytes, nbuf_x2):
    """Rough per-pass VMEM requirement (double-buffered tiles + resident scratch)."""
    p1 = 2 * rb * tile_n * xbytes + rb * C * 4 + 2 * rb * C * attn_bytes
    if rb != C:                                   # row-split path also streams the full x RHS
        p1 += 2 * C * tile_n * xbytes
    p2 = 2 * C * C * attn_bytes + (nbuf_x2 + 2) * C * tile_n * xbytes
    need = max(p1, p2)
    return int(min(max(need + 8 * _MIB, 32 * _MIB), 56 * _MIB))


def _maybe_buffered_spec(block_shape, index_map, nbuf):
    """BlockSpec with N-deep pipelining if the installed Pallas supports pipeline_mode."""
    if nbuf > 2:
        try:
            return pl.BlockSpec(block_shape, index_map, pipeline_mode=pl.Buffered(nbuf))
        except (TypeError, AttributeError):
            pass
    return pl.BlockSpec(block_shape, index_map)


# ----------------------------------------------------------------------------------------------
# Kernels
# ----------------------------------------------------------------------------------------------
def _finalize_attention(gamma_ref, attn_ref, energy, exact_recip):
    # softmax(rowmax(E) - E) == softmax(rowmin(E) - E) (per-row shift invariance of softmax);
    # the rowmin form needs a single XLU reduction and its shifted logits are <= 0 (stable).
    shifted = jnp.min(energy, axis=-1, keepdims=True) - energy
    p = jnp.exp(shifted)
    denom = jnp.sum(p, axis=-1, keepdims=True)            # in [1, C]
    if exact_recip:
        attn = p / denom
    else:
        attn = p * pl.reciprocal(denom, approx=True)       # EUP slot, ~free
    # Fold gamma into the (rows, C) attention so pass 2 never rescales the wide (C, N) slab.
    attn_ref[0] = (gamma_ref[0] * attn).astype(attn_ref.dtype)


def _energy_kernel(gamma_ref, x_ref, attn_ref, acc_ref, *, compute_dtype, exact_recip):
    """Pass 1: accumulate energy = x @ x^T over N tiles; finalize gamma*attention."""
    n = pl.program_id(1)

    @pl.when(n == 0)
    def _():
        acc_ref[...] = jnp.zeros_like(acc_ref)

    xb = x_ref[0].astype(compute_dtype)                    # (C, tile_n)
    # One long-K dot per grid step -> the (C,C) accumulator RMW happens once per step.
    acc_ref[...] += lax.dot_general(xb, xb, (((1,), (1,)), ((), ())),
                                    preferred_element_type=jnp.float32)

    @pl.when(n == pl.num_programs(1) - 1)
    def _():
        _finalize_attention(gamma_ref, attn_ref, acc_ref[...], exact_recip)


def _energy_rowsplit_kernel(gamma_ref, xrow_ref, xfull_ref, attn_ref, acc_ref, *,
                            compute_dtype, exact_recip):
    """Pass 1 (v7x, B==1): row-block of energy = x[rows] @ x^T; softmax is row-wise so exact."""
    n = pl.program_id(2)

    @pl.when(n == 0)
    def _():
        acc_ref[...] = jnp.zeros_like(acc_ref)

    a = xrow_ref[0].astype(compute_dtype)                  # (RB, tile_n) row block
    b = xfull_ref[0].astype(compute_dtype)                 # (C,  tile_n)
    acc_ref[...] += lax.dot_general(a, b, (((1,), (1,)), ((), ())),
                                    preferred_element_type=jnp.float32)

    @pl.when(n == pl.num_programs(2) - 1)
    def _():
        _finalize_attention(gamma_ref, attn_ref, acc_ref[...], exact_recip)


def _apply_kernel(attn_ref, x_ref, o_ref, *, compute_dtype):
    """Pass 2: out_tile = (gamma*attention) @ x_tile + x_tile."""
    x = x_ref[0]                                           # (C, tile_n), input dtype
    out = jnp.dot(attn_ref[0].astype(compute_dtype), x.astype(compute_dtype),
                  preferred_element_type=jnp.float32)
    # Single cast+add+store epilogue (keeps the lone v5e vector-store slot from binding).
    o_ref[0] = (out + x.astype(jnp.float32)).astype(o_ref.dtype)


# ----------------------------------------------------------------------------------------------
# Wrapper
# ----------------------------------------------------------------------------------------------
@functools.partial(jax.jit, static_argnames=("row_split", "precise_energy"))
def cam_forward(x, gamma, *, row_split=None, precise_energy=False):
    """CAM forward.

    x:      (B, C, H, W), float32 or bfloat16 (bf16 input halves HBM/VMEM traffic).
    gamma:  (1,) learnable scalar (Scale(0) in the PyTorch module).
    row_split:      None = auto (2 row blocks on v7x when B==1 and C is large), 1 = off,
                    k = force k row blocks in pass 1.
    precise_energy: True = f32 MXU operands, exact reciprocal and f32 attention (bit-closer
                    parity with the f32 PyTorch forward); False = bf16 MXU / approx recip.
    """
    B, C, H, W = x.shape
    N = H * W
    gamma = jnp.asarray(gamma, jnp.float32).reshape((1,))

    xbytes = x.dtype.itemsize
    compute_dtype = jnp.float32 if precise_energy else jnp.bfloat16
    attn_dtype = jnp.float32 if precise_energy else jnp.bfloat16
    attn_bytes = jnp.dtype(attn_dtype).itemsize

    tile_n, n_pad = _pick_tile_n(N, C, xbytes)
    num_n = n_pad // tile_n

    x_flat = x.reshape(B, C, N)
    if n_pad != N:
        # Zero columns add 0 to energy; padded output columns are sliced away below.
        x_flat = jnp.pad(x_flat, ((0, 0), (0, 0), (0, n_pad - N)))

    # Pass-1 row split only pays off with 2 TensorCores per chip (v7x) and B == 1 (otherwise the
    # batch axis already feeds both cores); on 1-TC chips it would only re-stream x.
    if row_split is None:
        row_split = 2 if (_is_v7x() and B == 1 and C >= 512 and C % 256 == 0) else 1
    if row_split > 1 and not (C % row_split == 0 and (C // row_split) % 16 == 0):
        row_split = 1
    rb = C // row_split

    # Small C: MXU underfilled in pass 2 -> DMA-bound; pipeline the x stream 3 deep.
    nbuf_x2 = 3 if (C < 256 and num_n >= 3) else 2

    vmem_limit = _vmem_limit_bytes(C, rb, tile_n, xbytes, attn_bytes, nbuf_x2)
    gamma_spec = pl.BlockSpec(memory_space=pltpu.MemorySpace.SMEM)

    # ---------------- Pass 1: gamma * softmax(rowshift(x @ x^T)) -> (B, C, C) ----------------
    if row_split == 1:
        energy_kernel = functools.partial(_energy_kernel, compute_dtype=compute_dtype,
                                          exact_recip=precise_energy)
        attn_scaled = pl.pallas_call(
            energy_kernel,
            out_shape=jax.ShapeDtypeStruct((B, C, C), attn_dtype),
            grid_spec=pltpu.PrefetchScalarGridSpec(
                num_scalar_prefetch=0,
                grid=(B, num_n),
                in_specs=[gamma_spec,
                          pl.BlockSpec((1, C, tile_n), lambda b, n: (b, 0, n))],
                out_specs=pl.BlockSpec((1, C, C), lambda b, n: (b, 0, 0)),   # resident over n
                scratch_shapes=[pltpu.VMEM((C, C), jnp.float32)]),
            compiler_params=pltpu.CompilerParams(
                dimension_semantics=("parallel", "arbitrary"),
                vmem_limit_bytes=vmem_limit),
        )(gamma, x_flat)
    else:
        energy_kernel = functools.partial(_energy_rowsplit_kernel, compute_dtype=compute_dtype,
                                          exact_recip=precise_energy)
        attn_scaled = pl.pallas_call(
            energy_kernel,
            out_shape=jax.ShapeDtypeStruct((B, C, C), attn_dtype),
            grid_spec=pltpu.PrefetchScalarGridSpec(
                num_scalar_prefetch=0,
                grid=(B, row_split, num_n),
                in_specs=[gamma_spec,
                          pl.BlockSpec((1, rb, tile_n), lambda b, r, n: (b, r, n)),  # row block
                          pl.BlockSpec((1, C, tile_n), lambda b, r, n: (b, 0, n))],  # full x
                out_specs=pl.BlockSpec((1, rb, C), lambda b, r, n: (b, r, 0)),
                scratch_shapes=[pltpu.VMEM((rb, C), jnp.float32)]),
            compiler_params=pltpu.CompilerParams(
                dimension_semantics=("parallel", "parallel", "arbitrary"),
                vmem_limit_bytes=vmem_limit),
        )(gamma, x_flat, x_flat)

    # ---------------- Pass 2: out = (gamma*attn) @ x + x, fully parallel over (B, n) ----------
    apply_kernel = functools.partial(_apply_kernel, compute_dtype=compute_dtype)
    out_flat = pl.pallas_call(
        apply_kernel,
        out_shape=jax.ShapeDtypeStruct((B, C, n_pad), x.dtype),
        grid_spec=pltpu.PrefetchScalarGridSpec(
            num_scalar_prefetch=0,
            grid=(B, num_n),
            in_specs=[pl.BlockSpec((1, C, C), lambda b, n: (b, 0, 0)),       # fetched once per b
                      _maybe_buffered_spec((1, C, tile_n), lambda b, n: (b, 0, n), nbuf_x2)],
            out_specs=pl.BlockSpec((1, C, tile_n), lambda b, n: (b, 0, n)),
        ),
        compiler_params=pltpu.CompilerParams(
            dimension_semantics=("parallel", "parallel"),
            vmem_limit_bytes=vmem_limit),
    )(attn_scaled, x_flat)

    return out_flat[:, :, :N].reshape(B, C, H, W)


# ----------------------------------------------------------------------------------------------
# References
# ----------------------------------------------------------------------------------------------
def cam_reference(x, gamma):
    """Pure f32 reference mirroring the PyTorch forward exactly."""
    B, C, H, W = x.shape
    q = x.astype(jnp.float32).reshape(B, C, -1)
    energy = jnp.einsum("bcn,bdn->bcd", q, q, precision=lax.Precision.HIGHEST)
    energy_new = jnp.max(energy, axis=-1, keepdims=True) - energy
    attn = jax.nn.softmax(energy_new, axis=-1)
    out = jnp.einsum("bcd,bdn->bcn", attn, q, precision=lax.Precision.HIGHEST)
    out = gamma[0] * out + q
    return out.reshape(B, C, H, W).astype(x.dtype)


def cam_reference_mixed(x, gamma):
    """Reference mirroring the kernel's default precision policy (bf16 matmul operands, f32
    accumulation/softmax, bf16 gamma*attention, residual in input precision) with the straight
    rowmax-shift softmax — checks the rowmin/gamma-fold algebra."""
    B, C, H, W = x.shape
    xf = x.reshape(B, C, -1).astype(jnp.float32)
    xb = xf.astype(jnp.bfloat16).astype(jnp.float32)
    energy = jnp.einsum("bcn,bdn->bcd", xb, xb, precision=lax.Precision.HIGHEST)
    energy_new = jnp.max(energy, axis=-1, keepdims=True) - energy
    attn = jax.nn.softmax(energy_new, axis=-1)
    attn_q = (gamma[0] * attn).astype(jnp.bfloat16).astype(jnp.float32)
    out = jnp.einsum("bcd,bdn->bcn", attn_q, xb, precision=lax.Precision.HIGHEST)
    out = out + xf
    return out.reshape(B, C, H, W).astype(x.dtype)


if __name__ == "__main__":
    key = jax.random.PRNGKey(0)
    ks = jax.random.split(key, 4)

    # 1) gamma = Scale(0): module is an exact identity at init.
    B, C, H, W = 2, 4, 16, 16
    x = jax.random.normal(ks[0], (B, C, H, W), dtype=jnp.float32)
    g0 = jnp.asarray([0.0], dtype=jnp.float32)
    out0 = jax.block_until_ready(cam_forward(x, g0))
    np.testing.assert_allclose(np.asarray(out0), np.asarray(x), rtol=0.0, atol=1e-6)
    np.testing.assert_allclose(np.asarray(out0), np.asarray(cam_reference(x, g0)),
                               rtol=0.0, atol=1e-6)

    # 2) gamma != 0: default bf16-MXU path vs the mixed-precision mirror reference.
    g1 = jnp.asarray([0.5], dtype=jnp.float32)
    out1 = jax.block_until_ready(cam_forward(x, g1))
    np.testing.assert_allclose(np.asarray(out1), np.asarray(cam_reference_mixed(x, g1)),
                               rtol=2e-2, atol=2e-2)

    # 3) precise_energy=True: f32 MXU + exact reciprocal vs the exact f32 reference.
    out1p = jax.block_until_ready(cam_forward(x, g1, precise_energy=True))
    np.testing.assert_allclose(np.asarray(out1p), np.asarray(cam_reference(x, g1)),
                               rtol=1e-3, atol=1e-3)

    # 4) bf16 activations end-to-end (halved HBM/VMEM traffic, dtype-preserving output).
    xb16 = x.astype(jnp.bfloat16)
    out2 = jax.block_until_ready(cam_forward(xb16, g1))
    np.testing.assert_allclose(np.asarray(out2.astype(jnp.float32)),
                               np.asarray(cam_reference_mixed(xb16, g1).astype(jnp.float32)),
                               rtol=3e-2, atol=3e-2)

    # 5) Small C, large N: divisor-based tiling, multi-step energy accumulation and the
    #    deep-buffered (Buffered(3)) apply-pass x stream.  (N=16384 -> tile_n=4096, 4 N-tiles.)
    x3 = 0.05 * jax.random.normal(ks[1], (1, 16, 128, 128), dtype=jnp.float32)
    g3 = jnp.asarray([0.25], dtype=jnp.float32)
    out3 = jax.block_until_ready(cam_forward(x3, g3))
    np.testing.assert_allclose(np.asarray(out3), np.asarray(cam_reference_mixed(x3, g3)),
                               rtol=2e-2, atol=2e-2)

    # 6) Forced pass-1 row split (the v7x two-TensorCore path), B=1, C=512.
    x4 = jax.random.normal(ks[2], (1, 512, 16, 16), dtype=jnp.float32)
    g4 = jnp.asarray([0.3], dtype=jnp.float32)
    out4 = jax.block_until_ready(cam_forward(x4, g4, row_split=2))
    np.testing.assert_allclose(np.asarray(out4), np.asarray(cam_reference_mixed(x4, g4)),
                               rtol=2e-2, atol=2e-2)

    print("KERNEL_OK")
</pallas_src>

<mosaic_0001>
module attributes {stable_mosaic.version = 11 : i64} {
  func.func @_apply_kernel(%arg0: i32, %arg1: i32, %arg2: memref<1x4x4xbf16, #tpu.memory_space<vmem>>, %arg3: memref<1x4x256xf32, #tpu.memory_space<vmem>>, %arg4: memref<1x4x256xf32, #tpu.memory_space<vmem>>) attributes {dimension_semantics = [#tpu.dimension_semantics<parallel>, #tpu.dimension_semantics<parallel>], iteration_bounds = array<i64: 2, 1>, scalar_prefetch = 0 : i64, scratch_operands = 0 : i64, tpu.core_type = #tpu.core_type<tc>, window_params = [{transform_indices = @transform_0, window_bounds = array<i64: 1, 4, 4>}, {transform_indices = @transform_1, window_bounds = array<i64: 1, 4, 256>}, {transform_indices = @transform_2, window_bounds = array<i64: 1, 4, 256>}]} {
    %c0 = arith.constant 0 : index
    %c0_0 = arith.constant 0 : index
    %c0_1 = arith.constant 0 : index
    %0 = vector.load %arg3[%c0, %c0_0, %c0_1] : memref<1x4x256xf32, #tpu.memory_space<vmem>>, vector<1x4x256xf32>
    %1 = vector.shape_cast %0 : vector<1x4x256xf32> to vector<4x256xf32>
    %c0_2 = arith.constant 0 : index
    %c0_3 = arith.constant 0 : index
    %c0_4 = arith.constant 0 : index
    %2 = vector.load %arg2[%c0_2, %c0_3, %c0_4] : memref<1x4x4xbf16, #tpu.memory_space<vmem>>, vector<1x4x4xbf16>
    %3 = vector.shape_cast %2 : vector<1x4x4xbf16> to vector<4x4xbf16>
    %4 = arith.truncf %1 : vector<4x256xf32> to vector<4x256xbf16>
    %cst = arith.constant dense<0.000000e+00> : vector<4x256xf32>
    %5 = tpu.matmul %3, %4, %cst {dimension_numbers = #tpu.dot_dimension_numbers<[1], [0], [0], [1], [0, 0, 1, 1], [], []>} : vector<4x4xbf16>, vector<4x256xbf16>, vector<4x256xf32> -> vector<4x256xf32>
    %6 = arith.addf %5, %1 : vector<4x256xf32>
    %c0_5 = arith.constant 0 : index
    %c0_6 = arith.constant 0 : index
    %c0_7 = arith.constant 0 : index
    %7 = vector.load %arg4[%c0_5, %c0_6, %c0_7] : memref<1x4x256xf32, #tpu.memory_space<vmem>>, vector<1x4x256xf32>
    %8 = vector.shape_cast %7 : vector<1x4x256xf32> to vector<4x256xf32>
    %9 = vector.shape_cast %6 : vector<4x256xf32> to vector<1x4x256xf32>
    tpu.vector_store %arg4[%c0_5, %c0_6, %c0_7], %9 {strides = array<i32>} : memref<1x4x256xf32, #tpu.memory_space<vmem>>, vector<1x4x256xf32>,
    return
  }
  func.func @transform_0(%arg0: i32, %arg1: i32) -> (i32, i32, i32) {
    %c0_i32 = arith.constant 0 : i32
    %c0_i32_0 = arith.constant 0 : i32
    %c0_i32_1 = arith.constant 0 : i32
    return %arg0, %c0_i32, %c0_i32_0 : i32, i32, i32
  }
  func.func @transform_1(%arg0: i32, %arg1: i32) -> (i32, i32, i32) {
    %c0_i32 = arith.constant 0 : i32
    %c0_i32_0 = arith.constant 0 : i32
    return %arg0, %c0_i32, %arg1 : i32, i32, i32
  }
  func.func @transform_2(%arg0: i32, %arg1: i32) -> (i32, i32, i32) {
    %c0_i32 = arith.constant 0 : i32
    %c0_i32_0 = arith.constant 0 : i32
    return %arg0, %c0_i32, %arg1 : i32, i32, i32
  }
}

module attributes {stable_mosaic.version = 11 : i64} {
  func.func @_energy_kernel(%arg0: i32, %arg1: i32, %arg2: memref<1xf32, #tpu.memory_space<smem>>, %arg3: memref<1x4x256xf32, #tpu.memory_space<vmem>>, %arg4: memref<1x4x4xbf16, #tpu.memory_space<vmem>>, %arg5: memref<4x4xf32, #tpu.memory_space<vmem>>) attributes {dimension_semantics = [#tpu.dimension_semantics<parallel>, #tpu.dimension_semantics<arbitrary>], iteration_bounds = array<i64: 2, 1>, scalar_prefetch = 0 : i64, scratch_operands = 1 : i64, tpu.core_type = #tpu.core_type<tc>, window_params = [{transform_indices = @transform_0, window_bounds = array<i64: 1>}, {transform_indices = @transform_1, window_bounds = array<i64: 1, 4, 256>}, {transform_indices = @transform_2, window_bounds = array<i64: 1, 4, 4>}]} {
    %c0_i32 = arith.constant 0 : i32
    %0 = arith.cmpi eq, %arg1, %c0_i32 : i32
    %1 = arith.extui %0 : i1 to i32
    %c0_i32_0 = arith.constant 0 : i32
    %2 = arith.cmpi ne, %1, %c0_i32_0 : i32
    scf.if %2 {
      %cst_9 = arith.constant 0.000000e+00 : f32
      %13 = vector.broadcast %cst_9 : f32 to vector<4x4xf32>
      %c0_10 = arith.constant 0 : index
      %c0_11 = arith.constant 0 : index
      %14 = vector.load %arg5[%c0_10, %c0_11] : memref<4x4xf32, #tpu.memory_space<vmem>>, vector<4x4xf32>
      tpu.vector_store %arg5[%c0_10, %c0_11], %13 {strides = array<i32>} : memref<4x4xf32, #tpu.memory_space<vmem>>, vector<4x4xf32>,
    } else {
    }
    %c0 = arith.constant 0 : index
    %c0_1 = arith.constant 0 : index
    %c0_2 = arith.constant 0 : index
    %3 = vector.load %arg3[%c0, %c0_1, %c0_2] : memref<1x4x256xf32, #tpu.memory_space<vmem>>, vector<1x4x256xf32>
    %4 = vector.shape_cast %3 : vector<1x4x256xf32> to vector<4x256xf32>
    %5 = arith.truncf %4 : vector<4x256xf32> to vector<4x256xbf16>
    %c0_3 = arith.constant 0 : index
    %c0_4 = arith.constant 0 : index
    %6 = vector.load %arg5[%c0_3, %c0_4] : memref<4x4xf32, #tpu.memory_space<vmem>>, vector<4x4xf32>
    %cst = arith.constant dense<0.000000e+00> : vector<4x4xf32>
    %7 = tpu.matmul %5, %5, %cst {dimension_numbers = #tpu.dot_dimension_numbers<[1], [1], [0], [0], [0, 0, 1, 0], [], []>} : vector<4x256xbf16>, vector<4x256xbf16>, vector<4x4xf32> -> vector<4x4xf32>
    %8 = arith.addf %6, %7 : vector<4x4xf32>
    %c0_5 = arith.constant 0 : index
    %c0_6 = arith.constant 0 : index
    %9 = vector.load %arg5[%c0_5, %c0_6] : memref<4x4xf32, #tpu.memory_space<vmem>>, vector<4x4xf32>
    tpu.vector_store %arg5[%c0_5, %c0_6], %8 {strides = array<i32>} : memref<4x4xf32, #tpu.memory_space<vmem>>, vector<4x4xf32>,
    %c0_i32_7 = arith.constant 0 : i32
    %10 = arith.cmpi eq, %arg1, %c0_i32_7 : i32
    %11 = arith.extui %10 : i1 to i32
    %c0_i32_8 = arith.constant 0 : i32
    %12 = arith.cmpi ne, %11, %c0_i32_8 : i32
    scf.if %12 {
      %c0_9 = arith.constant 0 : index
      %c0_10 = arith.constant 0 : index
      %13 = vector.load %arg5[%c0_9, %c0_10] : memref<4x4xf32, #tpu.memory_space<vmem>>, vector<4x4xf32>
      %cst_11 = arith.constant dense<0x7F800000> : vector<4xf32>
      %14 = vector.multi_reduction <minimumf>, %13, %cst_11 [1] : vector<4x4xf32> to vector<4xf32>
      %15 = vector.shape_cast %14 : vector<4xf32> to vector<4x1xf32>
      %16 = vector.broadcast %15 : vector<4x1xf32> to vector<4x4xf32>
      %17 = arith.subf %16, %13 : vector<4x4xf32>
      %18 = math.exp %17 : vector<4x4xf32>
      %cst_12 = arith.constant dense<0.000000e+00> : vector<4xf32>
      %19 = vector.multi_reduction <add>, %18, %cst_12 [1] : vector<4x4xf32> to vector<4xf32>
      %20 = vector.shape_cast %19 : vector<4xf32> to vector<4x1xf32>
      %21 = tpu.reciprocal %20 {approx = true} : vector<4x1xf32> -> vector<4x1xf32>
      %22 = vector.broadcast %21 : vector<4x1xf32> to vector<4x4xf32>
      %23 = arith.mulf %18, %22 : vector<4x4xf32>
      %c0_13 = arith.constant 0 : index
      %24 = memref.load %arg2[%c0_13] : memref<1xf32, #tpu.memory_space<smem>>
      %25 = vector.broadcast %24 : f32 to vector<4x4xf32>
      %26 = arith.mulf %25, %23 : vector<4x4xf32>
      %27 = arith.truncf %26 : vector<4x4xf32> to vector<4x4xbf16>
      %c0_14 = arith.constant 0 : index
      %c0_15 = arith.constant 0 : index
      %c0_16 = arith.constant 0 : index
      %28 = vector.load %arg4[%c0_14, %c0_15, %c0_16] : memref<1x4x4xbf16, #tpu.memory_space<vmem>>, vector<1x4x4xbf16>
      %29 = vector.shape_cast %28 : vector<1x4x4xbf16> to vector<4x4xbf16>
      %30 = vector.shape_cast %27 : vector<4x4xbf16> to vector<1x4x4xbf16>
      tpu.vector_store %arg4[%c0_14, %c0_15, %c0_16], %30 {strides = array<i32>} : memref<1x4x4xbf16, #tpu.memory_space<vmem>>, vector<1x4x4xbf16>,
    } else {
    }
    return
  }
  func.func @transform_0(%arg0: i32, %arg1: i32) -> i32 {
    %c0_i32 = arith.constant 0 : i32
    %c0_i32_0 = arith.constant 0 : i32
    return %c0_i32 : i32
  }
  func.func @transform_1(%arg0: i32, %arg1: i32) -> (i32, i32, i32) {
    %c0_i32 = arith.constant 0 : i32
    %c0_i32_0 = arith.constant 0 : i32
    return %arg0, %c0_i32, %arg1 : i32, i32, i32
  }
  func.func @transform_2(%arg0: i32, %arg1: i32) -> (i32, i32, i32) {
    %c0_i32 = arith.constant 0 : i32
    %c0_i32_0 = arith.constant 0 : i32
    %c0_i32_1 = arith.constant 0 : i32
    return %arg0, %c0_i32, %c0_i32_0 : i32, i32, i32
  }
}

</mosaic_0001>

<llo_original>
// kernel: cam_forward.3
$region0: #{cam_forward.3}
  #allocation0 [shape = 'u32[]', space=smem, size = 0x4, offset = 0x4, fixed_abs, tag = 'smem constant byte address 0x4 - core index']
  #allocation1 [shape = 'u32[144,128]{1,0:T(1,128)}', space=vmem, size = 0x12000, scoped, tag = 'internal scratch']
  %s0 = inlined_call_operand.vmem [shape: bf16[2,4,4], index: 0, kind: input, shape index: {}]
  %s1 = inlined_call_operand.vmem [shape: f32[2,4,256], index: 1, kind: input, shape index: {}]
  %s2 = inlined_call_operand.vmem [shape: f32[2,4,256], index: 2, kind: output, shape index: {}]
  %s3 = sld [smem:[#allocation0]]
  $region41: #{cam_forward.3} parent=0
    _
  %s5 = ssub.s32 1, %s3
  %s6 = scalar_select 0, %s5, %s3
  loop: start=0, step=1, limit=4
  $region2: #{cam_forward.3} parent=0 // loop_pre_header
    _
  $region3: #{cam_forward.3} parent=0 // loop_header
    %s8 = sphi 0, %s12
    %p9 = scmp.ge.s32.totalorder %s8, 4
    %s15 = sphi 0, %s27
    %s16 = sphi 0, %s23
    %s17 = sphi 0, %s15
    %s18 = sphi 0, %s16
    %s19 = sphi 0, %s17
    %s20 = sphi 0, %s18
    %s30 = sphi 0, %s32
    %s33 = sphi 0, %s30
    %s34 = sphi 0, %s33
    %s50 = sphi 0, %s34
    %s58 = sphi 0, %s60
    %s61 = sphi 0, %s58
    %s62 = sphi 0, %s61
    %s78 = sphi 0, %s62
    %s86 = sphi 0, %s88
    %s89 = sphi 0, %s86
    %s90 = sphi 0, %s89
    %s106 = sphi 0, %s90
  $region4: #{cam_forward.3} parent=0 // loop_header_branch
    %11 = sbr.rel (%p9) target = $region8
  $region5: #{cam_forward.3} parent=0 // loop_body
    %s13 = ssub.s32 %s8, 1
    %s14 = ssub.s32 %s8, 2
    %s21 = sadd.s32 1, %s16
    %p22 = scmp.ge.s32.totalorder %s21, 1
    %s23 = scalar_select %p22, 0, %s21
    %s24 = sadd.s32 1, %s15
    %s25 = scalar_select %p22, %s24, %s15
    %p26 = scmp.ge.s32.totalorder %s25, 2
    %s27 = scalar_select %p26, 0, %s25
    %s28 = ssub.s32 %s15, %s27
    %p29 = scmp.eq.s32.totalorder %s28, 0
    %s31 = sadd.s32 %s30, 1
    %s32 = scalar_select %p29, %s30, %s31
    %p35 = pneg %p29
    %p36 = scmp.eq.s32.totalorder %s8, 1
    %p37 = por %p35, %p36
    %p38 = scmp.ne.s32.totalorder %s30, %s33
    %p39 = scmp.eq.s32.totalorder %s8, 0
    %p40 = por %p38, %p39
    %p41 = scmp.ne.s32.totalorder %s30, %s33
    %p42 = scmp.eq.s32.totalorder %s13, 1
    %p43 = por %p41, %p42
    %p44 = scmp.ne.s32.totalorder %s33, %s34
    %p45 = scmp.eq.s32.totalorder %s13, 0
    %p46 = por %p44, %p45
    %p47 = scmp.ne.s32.totalorder %s33, %s34
    %p48 = scmp.eq.s32.totalorder %s14, 1
    %p49 = por %p47, %p48
    %p51 = scmp.ne.s32.totalorder %s34, %s50
    %p52 = scmp.eq.s32.totalorder %s14, 0
    %p53 = por %p51, %p52
    %s54 = ssub.s32 %s15, %s27
    %s55 = ssub.s32 %s16, %s23
    %s56 = sor.u32 %s54, %s55
    %p57 = scmp.eq.s32.totalorder %s56, 0
    %s59 = sadd.s32 %s58, 1
    %s60 = scalar_select %p57, %s58, %s59
    %p63 = pneg %p57
    %p64 = scmp.eq.s32.totalorder %s8, 1
    %p65 = por %p63, %p64
    %p66 = scmp.ne.s32.totalorder %s58, %s61
    %p67 = scmp.eq.s32.totalorder %s8, 0
    %p68 = por %p66, %p67
    %p69 = scmp.ne.s32.totalorder %s58, %s61
    %p70 = scmp.eq.s32.totalorder %s13, 1
    %p71 = por %p69, %p70
    %p72 = scmp.ne.s32.totalorder %s61, %s62
    %p73 = scmp.eq.s32.totalorder %s13, 0
    %p74 = por %p72, %p73
    %p75 = scmp.ne.s32.totalorder %s61, %s62
    %p76 = scmp.eq.s32.totalorder %s14, 1
    %p77 = por %p75, %p76
    %p79 = scmp.ne.s32.totalorder %s62, %s78
    %p80 = scmp.eq.s32.totalorder %s14, 0
    %p81 = por %p79, %p80
    %s82 = ssub.s32 %s15, %s27
    %s83 = ssub.s32 %s16, %s23
    %s84 = sor.u32 %s82, %s83
    %p85 = scmp.eq.s32.totalorder %s84, 0
    %s87 = sadd.s32 %s86, 1
    %s88 = scalar_select %p85, %s86, %s87
    %p91 = pneg %p85
    %p92 = scmp.eq.s32.totalorder %s8, 1
    %p93 = por %p91, %p92
    %p94 = scmp.ne.s32.totalorder %s86, %s89
    %p95 = scmp.eq.s32.totalorder %s8, 0
    %p96 = por %p94, %p95
    %p97 = scmp.ne.s32.totalorder %s86, %s89
    %p98 = scmp.eq.s32.totalorder %s13, 1
    %p99 = por %p97, %p98
    %p100 = scmp.ne.s32.totalorder %s89, %s90
    %p101 = scmp.eq.s32.totalorder %s13, 0
    %p102 = por %p100, %p101
    %p103 = scmp.ne.s32.totalorder %s89, %s90
    %p104 = scmp.eq.s32.totalorder %s14, 1
    %p105 = por %p103, %p104
    %p107 = scmp.ne.s32.totalorder %s90, %s106
    %p108 = scmp.eq.s32.totalorder %s14, 0
    %p109 = por %p107, %p108
    %p110 = scmp.le.s32.totalorder 1, %s8
    %p111 = scmp.lt.s32.totalorder %s8, 3
    %p112 = pnand %p110, %p111
    %p113 = pneg %p112
    // Predicated region
    $region9: #{cam_forward.3} parent=5 // pred_check
      _
    $region10: #{cam_forward.3} parent=5 // pred_check_branch
      %115 = sbr.rel (%p112) target = $region12
    $region11: #{cam_forward.3} parent=5 // pred_region
      %s116 = ssub.s32 %s8, 1
    $region12: #{cam_forward.3} parent=5 // pred_fallthru
      _
    %p117 = scmp.lt.s32.totalorder %s8, 2
    // Predicated region
    $region13: #{cam_forward.3} parent=5 // pred_check
      %p118 = pneg %p117
    $region14: #{cam_forward.3} parent=5 // pred_check_branch
      %120 = sbr.rel (%p118) target = $region16
    $region15: #{cam_forward.3} parent=5 // pred_region
      // Predicated region
      $region17: #{cam_forward.3} parent=15 // pred_check
        %p121 = pneg %p40
      $region18: #{cam_forward.3} parent=15 // pred_check_branch
        %123 = sbr.rel (%p121) target = $region20
      $region19: #{cam_forward.3} parent=15 // pred_region
        %p124 = scmp.lt.s32.totalorder %s15, 1
        %s125 = scalar_select %p124, %s15, 1
        %s126 = smul.addr %s125, 2
        %s127 = scalar_lea.vmem %s0, %s126
      $region20: #{cam_forward.3} parent=15 // pred_fallthru
        _
      // Predicated region
      $region21: #{cam_forward.3} parent=15 // pred_check
        %p128 = pneg %p68
      $region22: #{cam_forward.3} parent=15 // pred_check_branch
        %130 = sbr.rel (%p128) target = $region24
      $region23: #{cam_forward.3} parent=15 // pred_region
        %s131 = smul.u32 2, %s16
        %p132 = scmp.lt.s32.totalorder %s15, 1
        %s133 = scalar_select %p132, %s15, 1
        %p134 = scmp.lt.s32.totalorder %s131, 1
        %s135 = scalar_select %p134, %s131, 1
        %s136 = smul.addr %s133, 2
        %s137 = sadd.s32 %s135, %s136
        %s138 = smul.addr %s137, 4
        %s139 = scalar_lea.vmem %s1, %s138
        %s140 = smul.u32 2, %s16
      $region24: #{cam_forward.3} parent=15 // pred_fallthru
        _
    $region16: #{cam_forward.3} parent=5 // pred_fallthru
      _
    %p141 = scmp.le.s32.totalorder 1, %s8
    %p142 = scmp.lt.s32.totalorder %s8, 3
    %p143 = pnand %p141, %p142
    %p144 = pneg %p143
    // Predicated region
    $region25: #{cam_forward.3} parent=5 // pred_check
      _
    $region26: #{cam_forward.3} parent=5 // pred_check_branch
      %146 = sbr.rel (%p143) target = $region28
    $region27: #{cam_forward.3} parent=5 // pred_region
      %s147 = ssub.s32 %s8, 1
      %p148 = scmp.lt.s32.totalorder %s17, 1
      %s149 = scalar_select %p148, %s17, 1
      %s150 = smul.addr %s149, 2
      %s151 = scalar_lea.vmem %s0, %s150
      %p152 = pneg %p46
      %p153 = pneg %p43
      %s154 = smul.u32 2, %s18
      %p155 = scmp.lt.s32.totalorder %s17, 1
      %s156 = scalar_select %p155, %s17, 1
      %p157 = scmp.lt.s32.totalorder %s154, 1
      %s158 = scalar_select %p157, %s154, 1
      %s159 = smul.addr %s156, 2
      %s160 = sadd.s32 %s158, %s159
      %s161 = smul.addr %s160, 4
      %s162 = scalar_lea.vmem %s1, %s161
      %p163 = pneg %p74
      %p164 = pneg %p71
      %p165 = pneg %p102
      %p166 = pneg %p99
      %s167 = smul.u32 2, %s18
      %p168 = scmp.lt.s32.totalorder %s17, 1
      %s169 = scalar_select %p168, %s17, 1
      %p170 = scmp.lt.s32.totalorder %s167, 1
      %s171 = scalar_select %p170, %s167, 1
      %s172 = smul.addr %s169, 2
      %s173 = sadd.s32 %s171, %s172
      %s174 = smul.addr %s173, 4
      %s175 = scalar_lea.vmem %s2, %s174
      %p176 = scmp.lt.s32.totalorder %s17, 1
      %s177 = scalar_select %p176, %s17, 1
      %s178 = smul.addr %s177, 2
      %s179 = scalar_lea.vmem %s0, %s178
      %s180 = smul.u32 2, %s18
      %p181 = scmp.lt.s32.totalorder %s17, 1
      %s182 = scalar_select %p181, %s17, 1
      %p183 = scmp.lt.s32.totalorder %s180, 1
      %s184 = scalar_select %p183, %s180, 1
      %s185 = smul.addr %s182, 2
      %s186 = sadd.s32 %s184, %s185
      %s187 = smul.addr %s186, 4
      %s188 = scalar_lea.vmem %s1, %s187
      %s189 = smul.u32 2, %s18
      %s190 = smul.u32 2, %s18
      %p191 = scmp.lt.s32.totalorder %s17, 1
      %s192 = scalar_select %p191, %s17, 1
      %p193 = scmp.lt.s32.totalorder %s190, 1
      %s194 = scalar_select %p193, %s190, 1
      %s195 = smul.addr %s192, 2
      %s196 = sadd.s32 %s194, %s195
      %s197 = smul.addr %s196, 4
      %s198 = scalar_lea.vmem %s2, %s197
      %s199 = smul.u32 2, %s18
      %v201 = vld [vmem:[%s188] sm:$0xff]
      %v202 = vld [vmem:[%s179] sm:$0x3]
      %v204 = vcombine.high %v201, %v201
      %v206 = vpack.c.bf16 %v201, %v201
      %v207 = vpack.c.bf16 %v204, %v204
      %vm208 = vcmask 31744
      %v210 = vsel %vm208, %v202, 0
      %vm212 = vcmask 1041408
      %v214 = vsel %vm212, %v206, 0
      %v217 = vsel %vm212, %v207, 0
      %219 = vmatprep.subr.bf16.mxu0 %v217
      %220 = vmatpush1.bf16.msra.mxu0 %v214
      %221 = vmatprep.subr.bf16.mxu0 0
      %222 = vmatpush1.bf16.msra.mxu0 0
      %223 = vmatprep.subr.bf16.mxu0 0
      %224 = vmatpush1.bf16.msra.mxu0 0
      %225 = vmatprep.subr.bf16.mxu0 0
      %226 = vmatpush1.bf16.msra.mxu0 0
      %227 = vmatprep.subr.bf16.mxu0 0
      %228 = vmatpush1.bf16.msra.mxu0 0
      %229 = vmatprep.subr.bf16.mxu0 0
      %230 = vmatpush1.bf16.msra.mxu0 0
      %231 = vmatprep.subr.bf16.mxu0 0
      %232 = vmatpush1.bf16.msra.mxu0 0
      %233 = vmatprep.subr.bf16.mxu0 0
      %234 = vmatpush1.bf16.msra.mxu0 0
      %235 = vmatprep.subr.bf16.mxu0 0
      %236 = vmatpush1.bf16.msra.mxu0 0
      %237 = vmatprep.subr.bf16.mxu0 0
      %238 = vmatpush1.bf16.msra.mxu0 0
      %239 = vmatprep.subr.bf16.mxu0 0
      %240 = vmatpush1.bf16.msra.mxu0 0
      %241 = vmatprep.subr.bf16.mxu0 0
      %242 = vmatpush1.bf16.msra.mxu0 0
      %243 = vmatprep.subr.bf16.mxu0 0
      %244 = vmatpush1.bf16.msra.mxu0 0
      %245 = vmatprep.subr.bf16.mxu0 0
      %246 = vmatpush1.bf16.msra.mxu0 0
      %247 = vmatprep.subr.bf16.mxu0 0
      %248 = vmatpush1.bf16.msra.mxu0 0
      %249 = vmatprep.subr.bf16.mxu0 0
      %250 = vmatpush1.bf16.msra.mxu0 0
      %251 = vmatprep.mubr.bf16.mxu0 0
      %252 = vmatmul.mubr.bf16.gmra.mrb[0].mxu0 %v210
      %v253 = vpop.f32.mrb[0].mxu0
      %v254 = vadd.f32 %v201, %v253
      %v255 = vpop.f32.mrb[0].mxu0
      %v256 = vadd.f32 %v204, %v255
      %v257 = vpop.f32.mrb[0].mxu0
      %v258 = vpop.f32.mrb[0].mxu0
      %259 = vdwg.mxu0
      %v262 = vcombine.low %v254, %v256
      %264 = vst [vmem:[%s198] sm:$0xff] %v262
      %s265 = smul.u32 2, %s18
      %p266 = scmp.lt.s32.totalorder %s17, 1
      %s267 = scalar_select %p266, %s17, 1
      %p268 = scmp.lt.s32.totalorder %s265, 1
      %s269 = scalar_select %p268, %s265, 1
      %s270 = smul.addr %s267, 2
      %s271 = sadd.s32 %s269, %s270
      %s272 = smul.addr %s271, 4
      %s273 = scalar_lea.vmem %s2, %s272
      // Predicated region
      $region29: #{cam_forward.3} parent=27 // pred_check
        %p274 = pneg %p99
      $region30: #{cam_forward.3} parent=27 // pred_check_branch
        %276 = sbr.rel (%p274) target = $region32
      $region31: #{cam_forward.3} parent=27 // pred_region
        %s277 = smul.u32 2, %s18
      $region32: #{cam_forward.3} parent=27 // pred_fallthru
        _
    $region28: #{cam_forward.3} parent=5 // pred_fallthru
      _
    %p278 = scmp.le.s32.totalorder 2, %s8
    // Predicated region
    $region33: #{cam_forward.3} parent=5 // pred_check
      %p279 = pneg %p278
    $region34: #{cam_forward.3} parent=5 // pred_check_branch
      %281 = sbr.rel (%p279) target = $region36
    $region35: #{cam_forward.3} parent=5 // pred_region
      %s282 = ssub.s32 %s8, 2
      // Predicated region
      $region37: #{cam_forward.3} parent=35 // pred_check
        %p283 = pneg %p105
      $region38: #{cam_forward.3} parent=35 // pred_check_branch
        %285 = sbr.rel (%p283) target = $region40
      $region39: #{cam_forward.3} parent=35 // pred_region
        %s286 = smul.u32 2, %s20
        %p287 = scmp.lt.s32.totalorder %s19, 1
        %s288 = scalar_select %p287, %s19, 1
        %p289 = scmp.lt.s32.totalorder %s286, 1
        %s290 = scalar_select %p289, %s286, 1
        %s291 = smul.addr %s288, 2
        %s292 = sadd.s32 %s290, %s291
        %s293 = smul.addr %s292, 4
        %s294 = scalar_lea.vmem %s2, %s293
      $region40: #{cam_forward.3} parent=35 // pred_fallthru
        _
    $region36: #{cam_forward.3} parent=5 // pred_fallthru
      _
  $region6: #{cam_forward.3} parent=0 // loop_footer
    %s12 = sadd.s32 1, %s8
  $region7: #{cam_forward.3} parent=0 // loop_footer_branch
    %7 = sbr.rel target = $region3
  $region8: #{cam_forward.3} parent=0 // loop_exit
    _

// kernel: cam_forward.2
$region0: #{cam_forward.2}
  #allocation0 [shape = 'u32[]', space=smem, size = 0x4, offset = 0x4, fixed_abs, tag = 'smem constant byte address 0x4 - core index']
  #allocation1 [shape = 'u32[144,128]{1,0:T(1,128)}', space=vmem, size = 0x12000, scoped, tag = 'internal scratch']
  #allocation2 [shape = 'f32[4,4]{1,0:T(4,128)}', space=vmem, size = 0x800, scoped, tag = 'scratch operand']
  #allocation3 [shape = 'f32[1]{0:T(128)S(6)}', space=smem, size = 0x200, scoped, tag = 'scoped memory for cam_forward.2']
  %s0 = inlined_call_operand.<no memory space> [shape: f32[1], index: 0, kind: input, shape index: {}]
  %s1 = inlined_call_operand.vmem [shape: f32[2,4,256], index: 1, kind: input, shape index: {}]
  %s2 = inlined_call_operand.vmem [shape: bf16[2,4,4], index: 2, kind: output, shape index: {}]
  %s3 = sld [smem:[#allocation0]]
  $region49: #{cam_forward.2} parent=0
    _
  %s5 = ssub.s32 1, %s3
  %s6 = scalar_select 0, %s5, %s3
  %7 = sst [smem:[#allocation3]] %s0
  loop: start=0, step=1, limit=4
  $region2: #{cam_forward.2} parent=0 // loop_pre_header
    _
  $region3: #{cam_forward.2} parent=0 // loop_header
    %s9 = sphi 0, %s13
    %p10 = scmp.ge.s32.totalorder %s9, 4
    %s16 = sphi 0, %s28
    %s17 = sphi 0, %s24
    %s18 = sphi 0, %s16
    %s19 = sphi 0, %s17
    %s20 = sphi 0, %s18
    %s21 = sphi 0, %s19
    %s29 = sphi 0, %s29
    %s31 = sphi 0, %s29
    %s32 = sphi 0, %s31
    %s46 = sphi 0, %s32
    %s54 = sphi 0, %s56
    %s57 = sphi 0, %s54
    %s58 = sphi 0, %s57
    %s74 = sphi 0, %s58
    %s80 = sphi 0, %s82
    %s83 = sphi 0, %s80
    %s84 = sphi 0, %s83
    %s100 = sphi 0, %s84
  $region4: #{cam_forward.2} parent=0 // loop_header_branch
    %12 = sbr.rel (%p10) target = $region8
  $region5: #{cam_forward.2} parent=0 // loop_body
    %s14 = ssub.s32 %s9, 1
    %s15 = ssub.s32 %s9, 2
    %s22 = sadd.s32 1, %s17
    %p23 = scmp.ge.s32.totalorder %s22, 1
    %s24 = scalar_select %p23, 0, %s22
    %s25 = sadd.s32 1, %s16
    %s26 = scalar_select %p23, %s25, %s16
    %p27 = scmp.ge.s32.totalorder %s26, 2
    %s28 = scalar_select %p27, 0, %s26
    %s30 = sadd.s32 %s29, 1
    %p33 = scmp.eq.s32.totalorder %s9, 1
    %p34 = scmp.ne.s32.totalorder %s29, %s31
    %p35 = scmp.eq.s32.totalorder %s9, 0
    %p36 = por %p34, %p35
    %p37 = scmp.ne.s32.totalorder %s29, %s31
    %p38 = scmp.eq.s32.totalorder %s14, 1
    %p39 = por %p37, %p38
    %p40 = scmp.ne.s32.totalorder %s31, %s32
    %p41 = scmp.eq.s32.totalorder %s14, 0
    %p42 = por %p40, %p41
    %p43 = scmp.ne.s32.totalorder %s31, %s32
    %p44 = scmp.eq.s32.totalorder %s15, 1
    %p45 = por %p43, %p44
    %p47 = scmp.ne.s32.totalorder %s32, %s46
    %p48 = scmp.eq.s32.totalorder %s15, 0
    %p49 = por %p47, %p48
    %s50 = ssub.s32 %s16, %s28
    %s51 = ssub.s32 %s17, %s24
    %s52 = sor.u32 %s50, %s51
    %p53 = scmp.eq.s32.totalorder %s52, 0
    %s55 = sadd.s32 %s54, 1
    %s56 = scalar_select %p53, %s54, %s55
    %p59 = pneg %p53
    %p60 = scmp.eq.s32.totalorder %s9, 1
    %p61 = por %p59, %p60
    %p62 = scmp.ne.s32.totalorder %s54, %s57
    %p63 = scmp.eq.s32.totalorder %s9, 0
    %p64 = por %p62, %p63
    %p65 = scmp.ne.s32.totalorder %s54, %s57
    %p66 = scmp.eq.s32.totalorder %s14, 1
    %p67 = por %p65, %p66
    %p68 = scmp.ne.s32.totalorder %s57, %s58
    %p69 = scmp.eq.s32.totalorder %s14, 0
    %p70 = por %p68, %p69
    %p71 = scmp.ne.s32.totalorder %s57, %s58
    %p72 = scmp.eq.s32.totalorder %s15, 1
    %p73 = por %p71, %p72
    %p75 = scmp.ne.s32.totalorder %s58, %s74
    %p76 = scmp.eq.s32.totalorder %s15, 0
    %p77 = por %p75, %p76
    %s78 = ssub.s32 %s16, %s28
    %p79 = scmp.eq.s32.totalorder %s78, 0
    %s81 = sadd.s32 %s80, 1
    %s82 = scalar_select %p79, %s80, %s81
    %p85 = pneg %p79
    %p86 = scmp.eq.s32.totalorder %s9, 1
    %p87 = por %p85, %p86
    %p88 = scmp.ne.s32.totalorder %s80, %s83
    %p89 = scmp.eq.s32.totalorder %s9, 0
    %p90 = por %p88, %p89
    %p91 = scmp.ne.s32.totalorder %s80, %s83
    %p92 = scmp.eq.s32.totalorder %s14, 1
    %p93 = por %p91, %p92
    %p94 = scmp.ne.s32.totalorder %s83, %s84
    %p95 = scmp.eq.s32.totalorder %s14, 0
    %p96 = por %p94, %p95
    %p97 = scmp.ne.s32.totalorder %s83, %s84
    %p98 = scmp.eq.s32.totalorder %s15, 1
    %p99 = por %p97, %p98
    %p101 = scmp.ne.s32.totalorder %s84, %s100
    %p102 = scmp.eq.s32.totalorder %s15, 0
    %p103 = por %p101, %p102
    %p104 = scmp.le.s32.totalorder 1, %s9
    %p105 = scmp.lt.s32.totalorder %s9, 3
    %p106 = pnand %p104, %p105
    %p107 = pneg %p106
    // Predicated region
    $region9: #{cam_forward.2} parent=5 // pred_check
      _
    $region10: #{cam_forward.2} parent=5 // pred_check_branch
      %109 = sbr.rel (%p106) target = $region12
    $region11: #{cam_forward.2} parent=5 // pred_region
      %s110 = ssub.s32 %s9, 1
      // Predicated region
      $region13: #{cam_forward.2} parent=11 // pred_check
        %p111 = pneg %p42
      $region14: #{cam_forward.2} parent=11 // pred_check_branch
        %113 = sbr.rel (%p111) target = $region16
      $region15: #{cam_forward.2} parent=11 // pred_region
        _
      $region16: #{cam_forward.2} parent=11 // pred_fallthru
        _
    $region12: #{cam_forward.2} parent=5 // pred_fallthru
      _
    %p114 = scmp.lt.s32.totalorder %s9, 2
    // Predicated region
    $region17: #{cam_forward.2} parent=5 // pred_check
      %p115 = pneg %p114
    $region18: #{cam_forward.2} parent=5 // pred_check_branch
      %117 = sbr.rel (%p115) target = $region20
    $region19: #{cam_forward.2} parent=5 // pred_region
      // Predicated region
      $region21: #{cam_forward.2} parent=19 // pred_check
        %p118 = pneg %p64
      $region22: #{cam_forward.2} parent=19 // pred_check_branch
        %120 = sbr.rel (%p118) target = $region24
      $region23: #{cam_forward.2} parent=19 // pred_region
        %s121 = smul.u32 2, %s17
        %p122 = scmp.lt.s32.totalorder %s16, 1
        %s123 = scalar_select %p122, %s16, 1
        %p124 = scmp.lt.s32.totalorder %s121, 1
        %s125 = scalar_select %p124, %s121, 1
        %s126 = smul.addr %s123, 2
        %s127 = sadd.s32 %s125, %s126
        %s128 = smul.addr %s127, 4
        %s129 = scalar_lea.vmem %s1, %s128
        %s130 = smul.u32 2, %s17
      $region24: #{cam_forward.2} parent=19 // pred_fallthru
        _
    $region20: #{cam_forward.2} parent=5 // pred_fallthru
      _
    %p131 = scmp.le.s32.totalorder 1, %s9
    %p132 = scmp.lt.s32.totalorder %s9, 3
    %p133 = pnand %p131, %p132
    %p134 = pneg %p133
    // Predicated region
    $region25: #{cam_forward.2} parent=5 // pred_check
      _
    $region26: #{cam_forward.2} parent=5 // pred_check_branch
      %136 = sbr.rel (%p133) target = $region28
    $region27: #{cam_forward.2} parent=5 // pred_region
      %s137 = ssub.s32 %s9, 1
      %p138 = pneg %p42
      %p139 = pneg %p39
      %s140 = smul.u32 2, %s19
      %p141 = scmp.lt.s32.totalorder %s18, 1
      %s142 = scalar_select %p141, %s18, 1
      %p143 = scmp.lt.s32.totalorder %s140, 1
      %s144 = scalar_select %p143, %s140, 1
      %s145 = smul.addr %s142, 2
      %s146 = sadd.s32 %s144, %s145
      %s147 = smul.addr %s146, 4
      %s148 = scalar_lea.vmem %s1, %s147
      %p149 = pneg %p70
      %p150 = pneg %p67
      %p151 = pneg %p96
      %p152 = pneg %p93
      %p153 = scmp.lt.s32.totalorder %s18, 1
      %s154 = scalar_select %p153, %s18, 1
      %s155 = smul.addr %s154, 2
      %s156 = scalar_lea.vmem %s2, %s155
      %s157 = smul.u32 2, %s19
      %p158 = scmp.lt.s32.totalorder %s18, 1
      %s159 = scalar_select %p158, %s18, 1
      %p160 = scmp.lt.s32.totalorder %s157, 1
      %s161 = scalar_select %p160, %s157, 1
      %s162 = smul.addr %s159, 2
      %s163 = sadd.s32 %s161, %s162
      %s164 = smul.addr %s163, 4
      %s165 = scalar_lea.vmem %s1, %s164
      %s166 = smul.u32 2, %s19
      %p167 = scmp.lt.s32.totalorder %s18, 1
      %s168 = scalar_select %p167, %s18, 1
      %s169 = smul.addr %s168, 2
      %s170 = scalar_lea.vmem %s2, %s169
      %p172 = scmp.eq.s32.totalorder %s19, 0
      // Predicated region
      $region29: #{cam_forward.2} parent=27 // pred_check
        %p173 = pneg %p172
      $region30: #{cam_forward.2} parent=27 // pred_check_branch
        %175 = sbr.rel (%p173) target = $region32
      $region31: #{cam_forward.2} parent=27 // pred_region
        %vm176 = vcmask 27648
        %177 = vst.msk [vmem:[#allocation2] sm:$0xf] %vm176, 0.0
      $region32: #{cam_forward.2} parent=27 // pred_fallthru
        _
      %v178 = vld [vmem:[%s165] sm:$0xff]
      %v180 = vcombine.high %v178, %v178
      %v182 = vpack.c.bf16 %v178, %v178
      %v183 = vpack.c.bf16 %v180, %v180
      %v184 = vld [vmem:[#allocation2] sm:$0xf]
      %185 = vmatprep.subr.bf16.mxu0 %v183
      %186 = vmatpush1.bf16.xpose.msra.mxu0 %v182
      %187 = vmatprep.subr.bf16.mxu0 0
      %188 = vmatpush1.bf16.xpose.msra.mxu0 0
      %189 = vmatprep.subr.bf16.mxu0 0
      %190 = vmatpush1.bf16.xpose.msra.mxu0 0
      %191 = vmatprep.subr.bf16.mxu0 0
      %192 = vmatpush1.bf16.xpose.msra.mxu0 0
      %193 = vmatprep.subr.bf16.mxu0 0
      %194 = vmatpush1.bf16.xpose.msra.mxu0 0
      %195 = vmatprep.subr.bf16.mxu0 0
      %196 = vmatpush1.bf16.xpose.msra.mxu0 0
      %197 = vmatprep.subr.bf16.mxu0 0
      %198 = vmatpush1.bf16.xpose.msra.mxu0 0
      %199 = vmatprep.subr.bf16.mxu0 0
      %200 = vmatpush1.bf16.xpose.msra.mxu0 0
      %201 = vmatprep.subr.bf16.mxu0 0
      %202 = vmatpush1.bf16.xpose.msra.mxu0 0
      %203 = vmatprep.subr.bf16.mxu0 0
      %204 = vmatpush1.bf16.xpose.msra.mxu0 0
      %205 = vmatprep.subr.bf16.mxu0 0
      %206 = vmatpush1.bf16.xpose.msra.mxu0 0
      %207 = vmatprep.subr.bf16.mxu0 0
      %208 = vmatpush1.bf16.xpose.msra.mxu0 0
      %209 = vmatprep.subr.bf16.mxu0 0
      %210 = vmatpush1.bf16.xpose.msra.mxu0 0
      %211 = vmatprep.subr.bf16.mxu0 0
      %212 = vmatpush1.bf16.xpose.msra.mxu0 0
      %213 = vmatprep.subr.bf16.mxu0 0
      %214 = vmatpush1.bf16.xpose.msra.mxu0 0
      %215 = vmatprep.subr.bf16.mxu0 0
      %216 = vmatpush1.bf16.xpose.msra.mxu0 0
      %217 = vmatprep.mubr.bf16.mxu0 %v183
      %218 = vmatmul.mubr.bf16.gmra.mrb[0].mxu0 %v182
      %v219 = vpop.f32.mrb[0].mxu0
      %v220 = vadd.f32 0.0, %v219
      %v221 = vpop.f32.mrb[0].mxu0
      %v222 = vpop.f32.mrb[0].mxu0
      %v223 = vpop.f32.mrb[0].mxu0
      %224 = vdwg.mxu0
      %v225 = vadd.f32 %v184, %v220
      %vm226 = vcmask 27648
      %227 = vst.msk [vmem:[#allocation2] sm:$0xf] %vm226, %v225
      // Predicated region
      $region33: #{cam_forward.2} parent=27 // pred_check
        %p228 = pneg %p172
      $region34: #{cam_forward.2} parent=27 // pred_check_branch
        %230 = sbr.rel (%p228) target = $region36
      $region35: #{cam_forward.2} parent=27 // pred_region
        %v231 = vld [vmem:[#allocation2] sm:$0xf]
        %v232 = vsel %vm226, %v231, inf
        %233 = vmin.xlane.f32.xlu0 %v232
        %v234 = vpop.xlane.xlu0 %233
        %v235 = vsub.f32 %v234, %v231
        %v236 = vmul.f32 %v235, 1.442695
        %v237 = vpow.pop %v236
        %v238 = vsel %vm226, %v237, 0.0
        %239 = vadd.xlane.f32.xlu0 %v238
        %v240 = vpop.xlane.xlu0 %239
        %v241 = vrcp.pop %v240
        %v242 = vmul.f32 %v237, %v241
        %s243 = sld [smem:[#allocation3]]
        %v244 = vstv %s243
        %v245 = vmul.f32 %v244, %v242
        %v246 = vpack.c.bf16 %v245, %v245
        %vm247 = vcmask 25600
        %248 = vst.msk [vmem:[%s170] sm:$0x3] %vm247, %v246
      $region36: #{cam_forward.2} parent=27 // pred_fallthru
        _
      %p249 = scmp.lt.s32.totalorder %s18, 1
      %s250 = scalar_select %p249, %s18, 1
      %s251 = smul.addr %s250, 2
      %s252 = scalar_lea.vmem %s2, %s251
      // Predicated region
      $region37: #{cam_forward.2} parent=27 // pred_check
        %p253 = pneg %p93
      $region38: #{cam_forward.2} parent=27 // pred_check_branch
        %255 = sbr.rel (%p253) target = $region40
      $region39: #{cam_forward.2} parent=27 // pred_region
        _
      $region40: #{cam_forward.2} parent=27 // pred_fallthru
        _
    $region28: #{cam_forward.2} parent=5 // pred_fallthru
      _
    %p256 = scmp.le.s32.totalorder 2, %s9
    // Predicated region
    $region41: #{cam_forward.2} parent=5 // pred_check
      %p257 = pneg %p256
    $region42: #{cam_forward.2} parent=5 // pred_check_branch
      %259 = sbr.rel (%p257) target = $region44
    $region43: #{cam_forward.2} parent=5 // pred_region
      %s260 = ssub.s32 %s9, 2
      // Predicated region
      $region45: #{cam_forward.2} parent=43 // pred_check
        %p261 = pneg %p99
      $region46: #{cam_forward.2} parent=43 // pred_check_branch
        %263 = sbr.rel (%p261) target = $region48
      $region47: #{cam_forward.2} parent=43 // pred_region
        %p264 = scmp.lt.s32.totalorder %s20, 1
        %s265 = scalar_select %p264, %s20, 1
        %s266 = smul.addr %s265, 2
        %s267 = scalar_lea.vmem %s2, %s266
      $region48: #{cam_forward.2} parent=43 // pred_fallthru
        _
    $region44: #{cam_forward.2} parent=5 // pred_fallthru
      _
  $region6: #{cam_forward.2} parent=0 // loop_footer
    %s13 = sadd.s32 1, %s9
  $region7: #{cam_forward.2} parent=0 // loop_footer_branch
    %8 = sbr.rel target = $region3
  $region8: #{cam_forward.2} parent=0 // loop_exit
    _

</llo_original>
